<compile_context>
chip_gen: v6e
topology: v6e:2x2x1
jax: 0.10.0
libtpu: 0.0.40
codegen_flags: <defaults>
</compile_context>

<pallas_src>
import functools

import jax
import jax.numpy as jnp
import numpy as np
from jax import lax
from jax.experimental import pallas as pl
from jax.experimental.pallas import tpu as pltpu


# ---------------------------------------------------------------------------
# Soft path: gumbel-softmax mixture of the embedding table (online softmax).
# Grid: (splits, vocab-tiles-per-split).  Each split writes an un-normalized
# partial (m, l, acc); the wrapper merges splits and normalizes.
# ---------------------------------------------------------------------------
def _soft_kernel(phi_ref, w_ref, gum_ref, tok_ref, m_ref, l_ref, acc_ref, *,
                 inv_tau):
    i = pl.program_id(1)

    @pl.when(i == 0)
    def _():
        m_ref[...] = jnp.full_like(m_ref, -jnp.inf)
        l_ref[...] = jnp.zeros_like(l_ref)
        acc_ref[...] = jnp.zeros_like(acc_ref)

    # logits_tile = phi @ W_tile^T without transposing W: contract E with E.
    # phi is already in w.dtype (cast hoisted to the wrapper).
    logits = lax.dot_general(
        phi_ref[...], w_ref[...],
        dimension_numbers=(((1,), (1,)), ((), ())),
        preferred_element_type=jnp.float32)
    # Softmax statistics in f32 (v5e has no bf16 VPU/EUP path).
    g = (logits + gum_ref[...].astype(jnp.float32)) * inv_tau

    m_prev = m_ref[...]
    m_new = jnp.maximum(m_prev, jnp.max(g, axis=-1, keepdims=True))
    # Fully-padded tiles are all -inf: substitute 0 so exp(-inf - 0) = 0 (no NaN).
    m_safe = jnp.where(m_new == -jnp.inf, 0.0, m_new)
    alpha = jnp.exp(m_prev - m_safe)
    p = jnp.exp(g - m_safe)                                    # un-normalized
    l_ref[...] = alpha * l_ref[...] + jnp.sum(p, axis=-1, keepdims=True)
    acc_ref[...] = alpha * acc_ref[...] + jnp.dot(
        p.astype(tok_ref.dtype), tok_ref[...],
        preferred_element_type=jnp.float32)
    m_ref[...] = m_new


# ---------------------------------------------------------------------------
# Hard (straight-through) path: streaming argmax over vocab tiles.
# ---------------------------------------------------------------------------
def _argmax_kernel(phi_ref, w_ref, gum_ref, m_ref, idx_ref):
    s = pl.program_id(0)
    i = pl.program_id(1)
    v_tile = w_ref.shape[0]

    @pl.when(i == 0)
    def _():
        m_ref[...] = jnp.full_like(m_ref, -jnp.inf)
        idx_ref[...] = jnp.zeros_like(idx_ref)

    logits = lax.dot_general(
        phi_ref[...], w_ref[...],
        dimension_numbers=(((1,), (1,)), ((), ())),
        preferred_element_type=jnp.float32)
    # argmax is invariant to the positive 1/tau scale -> dropped (dead compute).
    g = logits + gum_ref[...].astype(jnp.float32)

    local_max = jnp.max(g, axis=-1, keepdims=True)                       # [P,1]
    local_idx = jnp.argmax(g, axis=-1, keepdims=True).astype(jnp.int32)  # [P,1]
    global_idx = local_idx + (s * pl.num_programs(1) + i) * v_tile

    better = local_max > m_ref[...]     # strict '>' keeps first-occurrence ties
    m_ref[...] = jnp.where(better, local_max, m_ref[...])
    idx_ref[...] = jnp.where(better, global_idx, idx_ref[...])


# ---------------------------------------------------------------------------
# Generation-aware planning helpers.
# ---------------------------------------------------------------------------
def _round_up(x, m):
    return ((x + m - 1) // m) * m


def _vmem_capacity_bytes():
    try:
        cap = getattr(pltpu.get_tpu_info(), "vmem_capacity_bytes", None)
        if cap:
            return int(cap)
    except Exception:
        pass
    return 64 << 20            # conservative fallback = v7x per-TensorCore VMEM


def _default_num_splits():
    # Use both TensorCores where the hardware reports them (v7x); fallback 1.
    try:
        info = pltpu.get_tpu_info()
        for name in ("num_tensorcores", "num_cores", "core_count"):
            n = getattr(info, name, None)
            if isinstance(n, int) and 1 <= n <= 8:
                return n
    except Exception:
        pass
    return 1


def _plan(P, E, V, stream_itemsizes, requested_vt, num_splits):
    """Pick (v_tile, num_splits, vmem_limit_bytes) from the chip's VMEM size."""
    cap = _vmem_capacity_bytes()
    budget = int(0.70 * cap)
    # Bytes per vocab column: double-buffered streamed table rows + gumbel col.
    per_vt = 2 * (E * sum(stream_itemsizes) + P * 4)
    # Resident: phi (+ pipeline copy) and the partial (m, l, acc) output blocks.
    resident = 2 * P * E * 4 + 2 * P * (E + 2) * 4 + (1 << 20)
    vt_cap = max((budget - resident) // per_vt, 128)
    vt = 2048 if requested_vt is None else int(requested_vt)
    vt = min(vt, vt_cap, _round_up(V, 128))
    vt = max((vt // 128) * 128, 128)                 # multiple of 128 lanes
    splits = _default_num_splits() if num_splits is None else int(num_splits)
    splits = max(1, min(splits, -(-V // vt)))        # never an all-padding split
    need = per_vt * vt + resident
    # Never clamp below the actual need (the tile was shrunk to fit instead).
    vmem_limit = int(min(0.95 * cap, max(need + (4 << 20), 16 << 20)))
    return int(vt), int(splits), vmem_limit


# ---------------------------------------------------------------------------
# Wrapper
# ---------------------------------------------------------------------------
def soft_prompt_forward(phi, w, gumbel, token_embedding, *,
                        gumbel_tau=1.0, straight_through=False,
                        v_tile=None, num_splits=None, out_dtype=jnp.float32):
    """SoftPrompt forward.

    Tables are streamed in the dtype they are passed in; cast to bf16 ONCE
    outside the training step if bandwidth-bound (never per call).  Multiple
    prompts can be stacked along P to amortize the two V x E HBM streams.
    """
    P, E = phi.shape
    V, E2 = w.shape
    assert E == E2 and token_embedding.shape == (V, E)
    assert gumbel.shape == (P, V)
    assert float(gumbel_tau) > 0.0

    w_size = jnp.dtype(w.dtype).itemsize
    tok_size = jnp.dtype(token_embedding.dtype).itemsize
    stream_sizes = [w_size] if straight_through else [w_size, tok_size]
    vt, S, vmem_limit = _plan(P, E, V, stream_sizes, v_tile, num_splits)

    # Pad the vocab axis to a multiple of (v_tile * splits).  Padded columns
    # get gumbel = -inf: exp(-inf) = 0 for the softmax, never wins the argmax.
    V_pad = _round_up(V, vt * S)
    w_p, gum_p, tok_p = w, gumbel, token_embedding
    if V_pad != V:
        pad = V_pad - V
        w_p = jnp.pad(w, ((0, pad), (0, 0)))
        gum_p = jnp.pad(gumbel, ((0, 0), (0, pad)), constant_values=-jnp.inf)
        if not straight_through:
            tok_p = jnp.pad(token_embedding, ((0, pad), (0, 0)))

    K = V_pad // (vt * S)                      # vocab tiles per split
    phi_c = phi.astype(w.dtype)                # cast hoisted out of the tile loop
    inv_tau = 1.0 / float(gumbel_tau)

    compiler_params = pltpu.CompilerParams(
        dimension_semantics=("parallel", "arbitrary"),
        vmem_limit_bytes=vmem_limit)

    if straight_through:
        cost = pl.CostEstimate(
            flops=int(2 * P * V * E),
            transcendentals=0,
            bytes_accessed=int(V_pad * E * w_size + P * V_pad * 4 + P * E * 4))
        m_p, idx_p = pl.pallas_call(
            _argmax_kernel,
            out_shape=(jax.ShapeDtypeStruct((S, P, 1), jnp.float32),
                       jax.ShapeDtypeStruct((S, P, 1), jnp.int32)),
            grid_spec=pltpu.PrefetchScalarGridSpec(
                num_scalar_prefetch=0,
                grid=(S, K),
                in_specs=[
                    pl.BlockSpec((P, E), lambda s, i: (0, 0)),            # phi
                    pl.BlockSpec((vt, E), lambda s, i: (s * K + i, 0)),   # W
                    pl.BlockSpec((P, vt), lambda s, i: (0, s * K + i)),   # gumbel
                ],
                out_specs=[
                    pl.BlockSpec((None, P, 1), lambda s, i: (s, 0, 0)),   # m
                    pl.BlockSpec((None, P, 1), lambda s, i: (s, 0, 0)),   # idx
                ]),
            compiler_params=compiler_params,
            cost_estimate=cost,
        )(phi_c, w_p, gum_p)
        # Merge splits: highest max wins; ties -> lowest split (first occurrence,
        # matching jnp.argmax tie-breaking over the full vocab).
        best = jnp.argmax(m_p[:, :, 0], axis=0)                           # [P]
        idx = jnp.take_along_axis(idx_p[:, :, 0], best[None, :], axis=0)[0]
        # Forward value of straight-through == hard one-hot @ table == row gather.
        return jnp.take(token_embedding, idx, axis=0).astype(out_dtype)

    cost = pl.CostEstimate(
        flops=int(4 * P * V * E),
        transcendentals=int(P * V),
        bytes_accessed=int(V_pad * E * (w_size + tok_size) + P * V_pad * 4
                           + S * P * (E + 2) * 4))
    m_p, l_p, acc_p = pl.pallas_call(
        functools.partial(_soft_kernel, inv_tau=inv_tau),
        out_shape=(jax.ShapeDtypeStruct((S, P, 1), jnp.float32),
                   jax.ShapeDtypeStruct((S, P, 1), jnp.float32),
                   jax.ShapeDtypeStruct((S, P, E), jnp.float32)),
        grid_spec=pltpu.PrefetchScalarGridSpec(
            num_scalar_prefetch=0,
            grid=(S, K),
            in_specs=[
                pl.BlockSpec((P, E), lambda s, i: (0, 0)),                # phi
                pl.BlockSpec((vt, E), lambda s, i: (s * K + i, 0)),       # W
                pl.BlockSpec((P, vt), lambda s, i: (0, s * K + i)),       # gumbel
                pl.BlockSpec((vt, E), lambda s, i: (s * K + i, 0)),       # tok
            ],
            out_specs=[
                pl.BlockSpec((None, P, 1), lambda s, i: (s, 0, 0)),       # m part
                pl.BlockSpec((None, P, 1), lambda s, i: (s, 0, 0)),       # l part
                pl.BlockSpec((None, P, E), lambda s, i: (s, 0, 0)),       # acc part
            ]),
        compiler_params=compiler_params,
        cost_estimate=cost,
    )(phi_c, w_p, gum_p, tok_p)

    # Merge per-split partials (tiny: S x P x E f32) and normalize.
    m_g = jnp.max(m_p, axis=0)                                            # [P,1]
    m_g = jnp.where(jnp.isneginf(m_g), 0.0, m_g)                          # defensive
    scale = jnp.exp(m_p - m_g)                                            # [S,P,1]
    l = jnp.sum(l_p * scale, axis=0)                                      # [P,1]
    acc = jnp.sum(acc_p * scale, axis=0)                                  # [P,E]
    return (acc / l).astype(out_dtype)


# ---------------------------------------------------------------------------
# Pure-JAX reference (mirrors the torch forward value, f32 output).
# ---------------------------------------------------------------------------
def soft_prompt_reference(phi, w, gumbel, token_embedding,
                          gumbel_tau=1.0, straight_through=False):
    logits = jnp.dot(phi.astype(w.dtype), w.T, preferred_element_type=jnp.float32)
    g = (logits + gumbel.astype(jnp.float32)) / gumbel_tau
    if straight_through:
        idx = jnp.argmax(g, axis=-1)
        return jnp.take(token_embedding, idx, axis=0).astype(jnp.float32)
    y = jax.nn.softmax(g, axis=-1)
    return jnp.dot(y.astype(token_embedding.dtype), token_embedding,
                   preferred_element_type=jnp.float32)


if __name__ == "__main__":
    # Small shapes consistent with SoftPrompt.__init__/forward.
    prompt_length = 8
    embedding_dim = 128
    vocab_size = 256

    key = jax.random.PRNGKey(0)
    k_phi, k_w, k_tok, k_gum = jax.random.split(key, 4)

    # Deterministic init matching nn.init.normal_(std=0.02).
    phi = 0.02 * jax.random.normal(k_phi, (prompt_length, embedding_dim),
                                   dtype=jnp.float32)
    w = 0.02 * jax.random.normal(k_w, (vocab_size, embedding_dim),
                                 dtype=jnp.float32)
    token_embedding = jax.random.normal(k_tok, (vocab_size, embedding_dim),
                                        dtype=jnp.float32)
    # Gumbel noise == -log(Exp(1)), generated host-side (torch RNG can't match).
    gumbel = jax.random.gumbel(k_gum, (prompt_length, vocab_size),
                               dtype=jnp.float32)

    # f32 tables: multi-tile accumulation, dual-split combine, auto planning.
    out_soft = soft_prompt_forward(phi, w, gumbel, token_embedding,
                                   gumbel_tau=1.0, straight_through=False,
                                   v_tile=128, num_splits=1)
    out_soft_split = soft_prompt_forward(phi, w, gumbel, token_embedding,
                                         gumbel_tau=0.7, straight_through=False,
                                         v_tile=128, num_splits=2)
    out_soft_auto = soft_prompt_forward(phi, w, gumbel, token_embedding)
    out_hard = soft_prompt_forward(phi, w, gumbel, token_embedding,
                                   gumbel_tau=1.0, straight_through=True,
                                   v_tile=128, num_splits=2)

    # bf16-streamed tables: cast ONCE outside the step (never per call).
    w_bf = w.astype(jnp.bfloat16)
    tok_bf = token_embedding.astype(jnp.bfloat16)
    out_soft_bf = soft_prompt_forward(phi, w_bf, gumbel, tok_bf,
                                      gumbel_tau=1.0, straight_through=False,
                                      v_tile=128)
    out_hard_bf = soft_prompt_forward(phi, w_bf, gumbel, tok_bf,
                                      gumbel_tau=1.0, straight_through=True,
                                      v_tile=128)

    # Ragged vocab (not a multiple of 128) exercises the -inf padding path.
    V_odd = 200
    w_o, tok_o, gum_o = w[:V_odd], token_embedding[:V_odd], gumbel[:, :V_odd]
    out_soft_odd = soft_prompt_forward(phi, w_o, gum_o, tok_o,
                                       gumbel_tau=1.0, straight_through=False,
                                       v_tile=128, num_splits=2)
    out_hard_odd = soft_prompt_forward(phi, w_o, gum_o, tok_o,
                                       gumbel_tau=1.0, straight_through=True,
                                       v_tile=128, num_splits=2)

    jax.block_until_ready((out_soft, out_soft_split, out_soft_auto, out_hard,
                           out_soft_bf, out_hard_bf, out_soft_odd, out_hard_odd))

    ref_soft = soft_prompt_reference(phi, w, gumbel, token_embedding, 1.0, False)
    ref_soft_t = soft_prompt_reference(phi, w, gumbel, token_embedding, 0.7, False)
    ref_hard = soft_prompt_reference(phi, w, gumbel, token_embedding, 1.0, True)
    ref_soft_bf = soft_prompt_reference(phi, w_bf, gumbel, tok_bf, 1.0, False)
    ref_hard_bf = soft_prompt_reference(phi, w_bf, gumbel, tok_bf, 1.0, True)
    ref_soft_odd = soft_prompt_reference(phi, w_o, gum_o, tok_o, 1.0, False)
    ref_hard_odd = soft_prompt_reference(phi, w_o, gum_o, tok_o, 1.0, True)

    np.testing.assert_allclose(np.asarray(out_soft), np.asarray(ref_soft),
                               rtol=2e-3, atol=2e-3)
    np.testing.assert_allclose(np.asarray(out_soft_split), np.asarray(ref_soft_t),
                               rtol=2e-3, atol=2e-3)
    np.testing.assert_allclose(np.asarray(out_soft_auto), np.asarray(ref_soft),
                               rtol=2e-3, atol=2e-3)
    np.testing.assert_allclose(np.asarray(out_hard), np.asarray(ref_hard),
                               rtol=1e-5, atol=1e-5)
    np.testing.assert_allclose(np.asarray(out_soft_bf), np.asarray(ref_soft_bf),
                               rtol=5e-2, atol=5e-2)
    np.testing.assert_allclose(np.asarray(out_hard_bf), np.asarray(ref_hard_bf),
                               rtol=5e-2, atol=5e-2)
    np.testing.assert_allclose(np.asarray(out_soft_odd), np.asarray(ref_soft_odd),
                               rtol=2e-3, atol=2e-3)
    np.testing.assert_allclose(np.asarray(out_hard_odd), np.asarray(ref_hard_odd),
                               rtol=1e-5, atol=1e-5)

    print("KERNEL_OK")
</pallas_src>

<mosaic_0001>
module attributes {stable_mosaic.version = 11 : i64} {
  func.func @_soft_kernel(%arg0: i32, %arg1: i32, %arg2: memref<8x128xf32, #tpu.memory_space<vmem>>, %arg3: memref<128x128xf32, #tpu.memory_space<vmem>>, %arg4: memref<8x128xf32, #tpu.memory_space<vmem>>, %arg5: memref<128x128xf32, #tpu.memory_space<vmem>>, %arg6: memref<1x8x1xf32, #tpu.memory_space<vmem>>, %arg7: memref<1x8x1xf32, #tpu.memory_space<vmem>>, %arg8: memref<1x8x128xf32, #tpu.memory_space<vmem>>) attributes {dimension_semantics = [#tpu.dimension_semantics<parallel>, #tpu.dimension_semantics<arbitrary>], iteration_bounds = array<i64: 1, 2>, scalar_prefetch = 0 : i64, scratch_operands = 0 : i64, tpu.core_type = #tpu.core_type<tc>, window_params = [{pipeline_mode = #tpu.pipeline_mode<synchronous>, transform_indices = @transform_0, window_bounds = array<i64: 8, 128>}, {transform_indices = @transform_1, window_bounds = array<i64: 128, 128>}, {transform_indices = @transform_2, window_bounds = array<i64: 8, 128>}, {transform_indices = @transform_3, window_bounds = array<i64: 128, 128>}, {transform_indices = @transform_4, window_bounds = array<i64: 1, 8, 1>}, {transform_indices = @transform_5, window_bounds = array<i64: 1, 8, 1>}, {transform_indices = @transform_6, window_bounds = array<i64: 1, 8, 128>}]} {
    %c0_i32 = arith.constant 0 : i32
    %0 = arith.cmpi eq, %arg1, %c0_i32 : i32
    %1 = arith.extui %0 : i1 to i32
    %c0_i32_0 = arith.constant 0 : i32
    %2 = arith.cmpi ne, %1, %c0_i32_0 : i32
    scf.if %2 {
      %cst_32 = arith.constant 0xFF800000 : f32
      %46 = vector.broadcast %cst_32 : f32 to vector<8x1xf32>
      %c0_33 = arith.constant 0 : index
      %c0_34 = arith.constant 0 : index
      %c0_35 = arith.constant 0 : index
      %47 = vector.load %arg6[%c0_33, %c0_34, %c0_35] : memref<1x8x1xf32, #tpu.memory_space<vmem>>, vector<1x8x1xf32>
      %48 = vector.shape_cast %47 : vector<1x8x1xf32> to vector<8x1xf32>
      %49 = vector.shape_cast %46 : vector<8x1xf32> to vector<1x8x1xf32>
      tpu.vector_store %arg6[%c0_33, %c0_34, %c0_35], %49 {strides = array<i32>} : memref<1x8x1xf32, #tpu.memory_space<vmem>>, vector<1x8x1xf32>,
      %cst_36 = arith.constant 0.000000e+00 : f32
      %50 = vector.broadcast %cst_36 : f32 to vector<8x1xf32>
      %c0_37 = arith.constant 0 : index
      %c0_38 = arith.constant 0 : index
      %c0_39 = arith.constant 0 : index
      %51 = vector.load %arg7[%c0_37, %c0_38, %c0_39] : memref<1x8x1xf32, #tpu.memory_space<vmem>>, vector<1x8x1xf32>
      %52 = vector.shape_cast %51 : vector<1x8x1xf32> to vector<8x1xf32>
      %53 = vector.shape_cast %50 : vector<8x1xf32> to vector<1x8x1xf32>
      tpu.vector_store %arg7[%c0_37, %c0_38, %c0_39], %53 {strides = array<i32>} : memref<1x8x1xf32, #tpu.memory_space<vmem>>, vector<1x8x1xf32>,
      %cst_40 = arith.constant 0.000000e+00 : f32
      %54 = vector.broadcast %cst_40 : f32 to vector<8x128xf32>
      %c0_41 = arith.constant 0 : index
      %c0_42 = arith.constant 0 : index
      %c0_43 = arith.constant 0 : index
      %55 = vector.load %arg8[%c0_41, %c0_42, %c0_43] : memref<1x8x128xf32, #tpu.memory_space<vmem>>, vector<1x8x128xf32>
      %56 = vector.shape_cast %55 : vector<1x8x128xf32> to vector<8x128xf32>
      %57 = vector.shape_cast %54 : vector<8x128xf32> to vector<1x8x128xf32>
      tpu.vector_store %arg8[%c0_41, %c0_42, %c0_43], %57 {strides = array<i32>} : memref<1x8x128xf32, #tpu.memory_space<vmem>>, vector<1x8x128xf32>,
    } else {
    }
    %c0 = arith.constant 0 : index
    %c0_1 = arith.constant 0 : index
    %3 = vector.load %arg2[%c0, %c0_1] : memref<8x128xf32, #tpu.memory_space<vmem>>, vector<8x128xf32>
    %c0_2 = arith.constant 0 : index
    %c0_3 = arith.constant 0 : index
    %4 = vector.load %arg3[%c0_2, %c0_3] : memref<128x128xf32, #tpu.memory_space<vmem>>, vector<128x128xf32>
    %cst = arith.constant dense<0.000000e+00> : vector<8x128xf32>
    %5 = tpu.matmul %3, %4, %cst {dimension_numbers = #tpu.dot_dimension_numbers<[1], [1], [0], [0], [0, 0, 1, 0], [], []>} : vector<8x128xf32>, vector<128x128xf32>, vector<8x128xf32> -> vector<8x128xf32>
    %c0_4 = arith.constant 0 : index
    %c0_5 = arith.constant 0 : index
    %6 = vector.load %arg4[%c0_4, %c0_5] : memref<8x128xf32, #tpu.memory_space<vmem>>, vector<8x128xf32>
    %7 = arith.addf %5, %6 : vector<8x128xf32>
    %cst_6 = arith.constant 1.000000e+00 : f32
    %8 = vector.broadcast %cst_6 : f32 to vector<8x128xf32>
    %9 = arith.mulf %7, %8 : vector<8x128xf32>
    %c0_7 = arith.constant 0 : index
    %c0_8 = arith.constant 0 : index
    %c0_9 = arith.constant 0 : index
    %10 = vector.load %arg6[%c0_7, %c0_8, %c0_9] : memref<1x8x1xf32, #tpu.memory_space<vmem>>, vector<1x8x1xf32>
    %11 = vector.shape_cast %10 : vector<1x8x1xf32> to vector<8x1xf32>
    %cst_10 = arith.constant dense<0xFF800000> : vector<8xf32>
    %12 = vector.multi_reduction <maximumf>, %9, %cst_10 [1] : vector<8x128xf32> to vector<8xf32>
    %13 = vector.shape_cast %12 : vector<8xf32> to vector<8x1xf32>
    %14 = arith.maximumf %11, %13 : vector<8x1xf32>
    %cst_11 = arith.constant 0xFF800000 : f32
    %15 = vector.broadcast %cst_11 : f32 to vector<8x1xf32>
    %16 = arith.cmpf oeq, %14, %15 : vector<8x1xf32>
    %cst_12 = arith.constant 0.000000e+00 : f32
    %17 = vector.broadcast %cst_12 : f32 to vector<8x1xf32>
    %18 = arith.select %16, %17, %14 : vector<8x1xi1>, vector<8x1xf32>
    %19 = arith.subf %11, %18 : vector<8x1xf32>
    %20 = math.exp %19 : vector<8x1xf32>
    %21 = vector.broadcast %18 : vector<8x1xf32> to vector<8x128xf32>
    %22 = arith.subf %9, %21 : vector<8x128xf32>
    %23 = math.exp %22 : vector<8x128xf32>
    %c0_13 = arith.constant 0 : index
    %c0_14 = arith.constant 0 : index
    %c0_15 = arith.constant 0 : index
    %24 = vector.load %arg7[%c0_13, %c0_14, %c0_15] : memref<1x8x1xf32, #tpu.memory_space<vmem>>, vector<1x8x1xf32>
    %25 = vector.shape_cast %24 : vector<1x8x1xf32> to vector<8x1xf32>
    %26 = arith.mulf %20, %25 : vector<8x1xf32>
    %cst_16 = arith.constant dense<0.000000e+00> : vector<8xf32>
    %27 = vector.multi_reduction <add>, %23, %cst_16 [1] : vector<8x128xf32> to vector<8xf32>
    %28 = vector.shape_cast %27 : vector<8xf32> to vector<8x1xf32>
    %29 = arith.addf %26, %28 : vector<8x1xf32>
    %c0_17 = arith.constant 0 : index
    %c0_18 = arith.constant 0 : index
    %c0_19 = arith.constant 0 : index
    %30 = vector.load %arg7[%c0_17, %c0_18, %c0_19] : memref<1x8x1xf32, #tpu.memory_space<vmem>>, vector<1x8x1xf32>
    %31 = vector.shape_cast %30 : vector<1x8x1xf32> to vector<8x1xf32>
    %32 = vector.shape_cast %29 : vector<8x1xf32> to vector<1x8x1xf32>
    tpu.vector_store %arg7[%c0_17, %c0_18, %c0_19], %32 {strides = array<i32>} : memref<1x8x1xf32, #tpu.memory_space<vmem>>, vector<1x8x1xf32>,
    %c0_20 = arith.constant 0 : index
    %c0_21 = arith.constant 0 : index
    %c0_22 = arith.constant 0 : index
    %33 = vector.load %arg8[%c0_20, %c0_21, %c0_22] : memref<1x8x128xf32, #tpu.memory_space<vmem>>, vector<1x8x128xf32>
    %34 = vector.shape_cast %33 : vector<1x8x128xf32> to vector<8x128xf32>
    %35 = vector.broadcast %20 : vector<8x1xf32> to vector<8x128xf32>
    %36 = arith.mulf %35, %34 : vector<8x128xf32>
    %c0_23 = arith.constant 0 : index
    %c0_24 = arith.constant 0 : index
    %37 = vector.load %arg5[%c0_23, %c0_24] : memref<128x128xf32, #tpu.memory_space<vmem>>, vector<128x128xf32>
    %cst_25 = arith.constant dense<0.000000e+00> : vector<8x128xf32>
    %38 = tpu.matmul %23, %37, %cst_25 {dimension_numbers = #tpu.dot_dimension_numbers<[1], [0], [0], [1], [0, 0, 1, 1], [], []>} : vector<8x128xf32>, vector<128x128xf32>, vector<8x128xf32> -> vector<8x128xf32>
    %39 = arith.addf %36, %38 : vector<8x128xf32>
    %c0_26 = arith.constant 0 : index
    %c0_27 = arith.constant 0 : index
    %c0_28 = arith.constant 0 : index
    %40 = vector.load %arg8[%c0_26, %c0_27, %c0_28] : memref<1x8x128xf32, #tpu.memory_space<vmem>>, vector<1x8x128xf32>
    %41 = vector.shape_cast %40 : vector<1x8x128xf32> to vector<8x128xf32>
    %42 = vector.shape_cast %39 : vector<8x128xf32> to vector<1x8x128xf32>
    tpu.vector_store %arg8[%c0_26, %c0_27, %c0_28], %42 {strides = array<i32>} : memref<1x8x128xf32, #tpu.memory_space<vmem>>, vector<1x8x128xf32>,
    %c0_29 = arith.constant 0 : index
    %c0_30 = arith.constant 0 : index
    %c0_31 = arith.constant 0 : index
    %43 = vector.load %arg6[%c0_29, %c0_30, %c0_31] : memref<1x8x1xf32, #tpu.memory_space<vmem>>, vector<1x8x1xf32>
    %44 = vector.shape_cast %43 : vector<1x8x1xf32> to vector<8x1xf32>
    %45 = vector.shape_cast %14 : vector<8x1xf32> to vector<1x8x1xf32>
    tpu.vector_store %arg6[%c0_29, %c0_30, %c0_31], %45 {strides = array<i32>} : memref<1x8x1xf32, #tpu.memory_space<vmem>>, vector<1x8x1xf32>,
    return
  }
  func.func @transform_0(%arg0: i32, %arg1: i32) -> (i32, i32) {
    %c0_i32 = arith.constant 0 : i32
    %c0_i32_0 = arith.constant 0 : i32
    %c0_i32_1 = arith.constant 0 : i32
    return %c0_i32, %c0_i32_0 : i32, i32
  }
  func.func @transform_1(%arg0: i32, %arg1: i32) -> (i32, i32) {
    %c2_i32 = arith.constant 2 : i32
    %0 = arith.muli %arg0, %c2_i32 : i32
    %1 = arith.addi %0, %arg1 : i32
    %c0_i32 = arith.constant 0 : i32
    %c0_i32_0 = arith.constant 0 : i32
    return %1, %c0_i32 : i32, i32
  }
  func.func @transform_2(%arg0: i32, %arg1: i32) -> (i32, i32) {
    %c2_i32 = arith.constant 2 : i32
    %0 = arith.muli %arg0, %c2_i32 : i32
    %1 = arith.addi %0, %arg1 : i32
    %c0_i32 = arith.constant 0 : i32
    %c0_i32_0 = arith.constant 0 : i32
    return %c0_i32, %1 : i32, i32
  }
  func.func @transform_3(%arg0: i32, %arg1: i32) -> (i32, i32) {
    %c2_i32 = arith.constant 2 : i32
    %0 = arith.muli %arg0, %c2_i32 : i32
    %1 = arith.addi %0, %arg1 : i32
    %c0_i32 = arith.constant 0 : i32
    %c0_i32_0 = arith.constant 0 : i32
    return %1, %c0_i32 : i32, i32
  }
  func.func @transform_4(%arg0: i32, %arg1: i32) -> (i32, i32, i32) {
    %c0_i32 = arith.constant 0 : i32
    %c0_i32_0 = arith.constant 0 : i32
    %c0_i32_1 = arith.constant 0 : i32
    return %arg0, %c0_i32, %c0_i32_0 : i32, i32, i32
  }
  func.func @transform_5(%arg0: i32, %arg1: i32) -> (i32, i32, i32) {
    %c0_i32 = arith.constant 0 : i32
    %c0_i32_0 = arith.constant 0 : i32
    %c0_i32_1 = arith.constant 0 : i32
    return %arg0, %c0_i32, %c0_i32_0 : i32, i32, i32
  }
  func.func @transform_6(%arg0: i32, %arg1: i32) -> (i32, i32, i32) {
    %c0_i32 = arith.constant 0 : i32
    %c0_i32_0 = arith.constant 0 : i32
    %c0_i32_1 = arith.constant 0 : i32
    return %arg0, %c0_i32, %c0_i32_0 : i32, i32, i32
  }
}

</mosaic_0001>

<llo_original>
// kernel: tpu_custom_call.1
$region0: #{tpu_custom_call.1}
  #allocation0 [shape = 'u32[]', space=smem, size = 0x4, offset = 0x4, fixed_abs, tag = 'smem constant byte address 0x4 - core index']
  #allocation1 [shape = 'u32[144,128]{1,0:T(1,128)}', space=vmem, size = 0x12000, scoped, tag = 'internal scratch']
  %s0 = inlined_call_operand.hbm [shape: f32[8,128], index: 0, kind: input, shape index: {}]
  %s1 = inlined_call_operand.hbm [shape: f32[256,128], index: 1, kind: input, shape index: {}]
  %s2 = inlined_call_operand.hbm [shape: f32[8,256], index: 2, kind: input, shape index: {}]
  %s3 = inlined_call_operand.hbm [shape: f32[256,128], index: 3, kind: input, shape index: {}]
  %s4 = inlined_call_operand.vmem [shape: f32[1,8,1], index: 4, kind: output, shape index: {0}]
  %s5 = inlined_call_operand.vmem [shape: f32[1,8,1], index: 5, kind: output, shape index: {1}]
  %s6 = inlined_call_operand.hbm [shape: f32[1,8,128], index: 6, kind: output, shape index: {2}]
  %7 = xla_tuple %s4, %s5, %s6
  %s8 = sld [smem:[#allocation0]]
  $region85: #{tpu_custom_call.1} parent=0
    _
  %s10 = ssub.s32 1, %s8
  %s11 = scalar_select 0, %s10, %s8
  $region1: #{tpu_custom_call.1} parent=0
    #allocation2 [shape = 'u8[4096]{0}', space=vmem, size = 0x1000, scoped, tag = 'input window, operand 0, single buffered']
    #allocation3 [shape = 's32[2]{0}', space=sflag, size = 0x8, scoped, tag = 'scoped memory for tpu_custom_call.1']
    #allocation4 [shape = 's32[2]{0}', space=sflag, size = 0x8, scoped, tag = 'scoped memory for tpu_custom_call.1']
    #allocation5 [shape = 'u8[131072]{0}', space=vmem, size = 0x20000, scoped, tag = 'input window, operand 1']
    #allocation6 [shape = 's32[2]{0}', space=sflag, size = 0x8, scoped, tag = 'scoped memory for tpu_custom_call.1']
    #allocation7 [shape = 'u8[8192]{0}', space=vmem, size = 0x2000, scoped, tag = 'input window, operand 2']
    #allocation8 [shape = 'u8[131072]{0}', space=vmem, size = 0x20000, scoped, tag = 'input window, operand 3']
    #allocation9 [shape = 's32[2]{0}', space=sflag, size = 0x8, scoped, tag = 'scoped memory for tpu_custom_call.1']
    #allocation10 [shape = 'u8[4096]{0}', space=vmem, size = 0x1000, scoped, tag = 'output window, operand 2, single buffered']
    %12 = vsyncpa [#allocation3], 0
    %13 = vsyncpa [#allocation6], 0
    %s14 = scalar_lea.sflag [#allocation6], 1
    %15 = vsyncpa %s14, 0
    %16 = vsyncpa [#allocation9], 0
    %s17 = scalar_lea.sflag [#allocation9], 1
    %18 = vsyncpa %s17, 0
    %19 = vsyncpa [#allocation4], 0
    loop: start=0, step=1, limit=4
    $region2: #{tpu_custom_call.1} parent=1 // loop_pre_header
      _
    $region3: #{tpu_custom_call.1} parent=1 // loop_header
      %s21 = sphi 0, %s25
      %p22 = scmp.ge.s32.totalorder %s21, 4
      %s28 = sphi 0, %s40
      %s29 = sphi 0, %s36
      %s30 = sphi 0, %s28
      %s31 = sphi 0, %s29
      %s32 = sphi 0, %s30
      %s33 = sphi 0, %s31
      %s41 = sphi 0, %s41
      %s43 = sphi 0, %s41
      %s44 = sphi 0, %s43
      %s58 = sphi 0, %s44
      %s68 = sphi 0, %s70
      %s71 = sphi 0, %s68
      %s72 = sphi 0, %s71
      %s88 = sphi 0, %s72
      %s98 = sphi 0, %s100
      %s101 = sphi 0, %s98
      %s102 = sphi 0, %s101
      %s118 = sphi 0, %s102
      %s128 = sphi 0, %s130
      %s131 = sphi 0, %s128
      %s132 = sphi 0, %s131
      %s148 = sphi 0, %s132
      %s154 = sphi 0, %s156
      %s157 = sphi 0, %s154
      %s158 = sphi 0, %s157
      %s174 = sphi 0, %s158
      %s180 = sphi 0, %s182
      %s183 = sphi 0, %s180
      %s184 = sphi 0, %s183
      %s200 = sphi 0, %s184
      %s206 = sphi 0, %s208
      %s209 = sphi 0, %s206
      %s210 = sphi 0, %s209
      %s226 = sphi 0, %s210
    $region4: #{tpu_custom_call.1} parent=1 // loop_header_branch
      %24 = sbr.rel (%p22) target = $region8
    $region5: #{tpu_custom_call.1} parent=1 // loop_body
      %s26 = ssub.s32 %s21, 1
      %s27 = ssub.s32 %s21, 2
      %s34 = sadd.s32 1, %s29
      %p35 = scmp.ge.s32.totalorder %s34, 2
      %s36 = scalar_select %p35, 0, %s34
      %s37 = sadd.s32 1, %s28
      %s38 = scalar_select %p35, %s37, %s28
      %p39 = scmp.ge.s32.totalorder %s38, 1
      %s40 = scalar_select %p39, 0, %s38
      %s42 = sadd.s32 %s41, 1
      %p45 = scmp.eq.s32.totalorder %s21, 1
      %p46 = scmp.ne.s32.totalorder %s41, %s43
      %p47 = scmp.eq.s32.totalorder %s21, 0
      %p48 = por %p46, %p47
      %p49 = scmp.ne.s32.totalorder %s41, %s43
      %p50 = scmp.eq.s32.totalorder %s26, 1
      %p51 = por %p49, %p50
      %p52 = scmp.ne.s32.totalorder %s43, %s44
      %p53 = scmp.eq.s32.totalorder %s26, 0
      %p54 = por %p52, %p53
      %p55 = scmp.ne.s32.totalorder %s43, %s44
      %p56 = scmp.eq.s32.totalorder %s27, 1
      %p57 = por %p55, %p56
      %p59 = scmp.ne.s32.totalorder %s44, %s58
      %p60 = scmp.eq.s32.totalorder %s27, 0
      %p61 = por %p59, %p60
      %s62 = smul.u32 %s28, 2
      %s63 = sadd.s32 %s62, %s29
      %s64 = smul.u32 %s40, 2
      %s65 = sadd.s32 %s64, %s36
      %s66 = ssub.s32 %s63, %s65
      %p67 = scmp.eq.s32.totalorder %s66, 0
      %s69 = sadd.s32 %s68, 1
      %s70 = scalar_select %p67, %s68, %s69
      %p73 = pneg %p67
      %p74 = scmp.eq.s32.totalorder %s21, 1
      %p75 = por %p73, %p74
      %p76 = scmp.ne.s32.totalorder %s68, %s71
      %p77 = scmp.eq.s32.totalorder %s21, 0
      %p78 = por %p76, %p77
      %p79 = scmp.ne.s32.totalorder %s68, %s71
      %p80 = scmp.eq.s32.totalorder %s26, 1
      %p81 = por %p79, %p80
      %p82 = scmp.ne.s32.totalorder %s71, %s72
      %p83 = scmp.eq.s32.totalorder %s26, 0
      %p84 = por %p82, %p83
      %p85 = scmp.ne.s32.totalorder %s71, %s72
      %p86 = scmp.eq.s32.totalorder %s27, 1
      %p87 = por %p85, %p86
      %p89 = scmp.ne.s32.totalorder %s72, %s88
      %p90 = scmp.eq.s32.totalorder %s27, 0
      %p91 = por %p89, %p90
      %s92 = smul.u32 %s28, 2
      %s93 = sadd.s32 %s92, %s29
      %s94 = smul.u32 %s40, 2
      %s95 = sadd.s32 %s94, %s36
      %s96 = ssub.s32 %s93, %s95
      %p97 = scmp.eq.s32.totalorder %s96, 0
      %s99 = sadd.s32 %s98, 1
      %s100 = scalar_select %p97, %s98, %s99
      %p103 = pneg %p97
      %p104 = scmp.eq.s32.totalorder %s21, 1
      %p105 = por %p103, %p104
      %p106 = scmp.ne.s32.totalorder %s98, %s101
      %p107 = scmp.eq.s32.totalorder %s21, 0
      %p108 = por %p106, %p107
      %p109 = scmp.ne.s32.totalorder %s98, %s101
      %p110 = scmp.eq.s32.totalorder %s26, 1
      %p111 = por %p109, %p110
      %p112 = scmp.ne.s32.totalorder %s101, %s102
      %p113 = scmp.eq.s32.totalorder %s26, 0
      %p114 = por %p112, %p113
      %p115 = scmp.ne.s32.totalorder %s101, %s102
      %p116 = scmp.eq.s32.totalorder %s27, 1
      %p117 = por %p115, %p116
      %p119 = scmp.ne.s32.totalorder %s102, %s118
      %p120 = scmp.eq.s32.totalorder %s27, 0
      %p121 = por %p119, %p120
      %s122 = smul.u32 %s28, 2
      %s123 = sadd.s32 %s122, %s29
      %s124 = smul.u32 %s40, 2
      %s125 = sadd.s32 %s124, %s36
      %s126 = ssub.s32 %s123, %s125
      %p127 = scmp.eq.s32.totalorder %s126, 0
      %s129 = sadd.s32 %s128, 1
      %s130 = scalar_select %p127, %s128, %s129
      %p133 = pneg %p127
      %p134 = scmp.eq.s32.totalorder %s21, 1
      %p135 = por %p133, %p134
      %p136 = scmp.ne.s32.totalorder %s128, %s131
      %p137 = scmp.eq.s32.totalorder %s21, 0
      %p138 = por %p136, %p137
      %p139 = scmp.ne.s32.totalorder %s128, %s131
      %p140 = scmp.eq.s32.totalorder %s26, 1
      %p141 = por %p139, %p140
      %p142 = scmp.ne.s32.totalorder %s131, %s132
      %p143 = scmp.eq.s32.totalorder %s26, 0
      %p144 = por %p142, %p143
      %p145 = scmp.ne.s32.totalorder %s131, %s132
      %p146 = scmp.eq.s32.totalorder %s27, 1
      %p147 = por %p145, %p146
      %p149 = scmp.ne.s32.totalorder %s132, %s148
      %p150 = scmp.eq.s32.totalorder %s27, 0
      %p151 = por %p149, %p150
      %s152 = ssub.s32 %s28, %s40
      %p153 = scmp.eq.s32.totalorder %s152, 0
      %s155 = sadd.s32 %s154, 1
      %s156 = scalar_select %p153, %s154, %s155
      %p159 = pneg %p153
      %p160 = scmp.eq.s32.totalorder %s21, 1
      %p161 = por %p159, %p160
      %p162 = scmp.ne.s32.totalorder %s154, %s157
      %p163 = scmp.eq.s32.totalorder %s21, 0
      %p164 = por %p162, %p163
      %p165 = scmp.ne.s32.totalorder %s154, %s157
      %p166 = scmp.eq.s32.totalorder %s26, 1
      %p167 = por %p165, %p166
      %p168 = scmp.ne.s32.totalorder %s157, %s158
      %p169 = scmp.eq.s32.totalorder %s26, 0
      %p170 = por %p168, %p169
      %p171 = scmp.ne.s32.totalorder %s157, %s158
      %p172 = scmp.eq.s32.totalorder %s27, 1
      %p173 = por %p171, %p172
      %p175 = scmp.ne.s32.totalorder %s158, %s174
      %p176 = scmp.eq.s32.totalorder %s27, 0
      %p177 = por %p175, %p176
      %s178 = ssub.s32 %s28, %s40
      %p179 = scmp.eq.s32.totalorder %s178, 0
      %s181 = sadd.s32 %s180, 1
      %s182 = scalar_select %p179, %s180, %s181
      %p185 = pneg %p179
      %p186 = scmp.eq.s32.totalorder %s21, 1
      %p187 = por %p185, %p186
      %p188 = scmp.ne.s32.totalorder %s180, %s183
      %p189 = scmp.eq.s32.totalorder %s21, 0
      %p190 = por %p188, %p189
      %p191 = scmp.ne.s32.totalorder %s180, %s183
      %p192 = scmp.eq.s32.totalorder %s26, 1
      %p193 = por %p191, %p192
      %p194 = scmp.ne.s32.totalorder %s183, %s184
      %p195 = scmp.eq.s32.totalorder %s26, 0
      %p196 = por %p194, %p195
      %p197 = scmp.ne.s32.totalorder %s183, %s184
      %p198 = scmp.eq.s32.totalorder %s27, 1
      %p199 = por %p197, %p198
      %p201 = scmp.ne.s32.totalorder %s184, %s200
      %p202 = scmp.eq.s32.totalorder %s27, 0
      %p203 = por %p201, %p202
      %s204 = ssub.s32 %s28, %s40
      %p205 = scmp.eq.s32.totalorder %s204, 0
      %s207 = sadd.s32 %s206, 1
      %s208 = scalar_select %p205, %s206, %s207
      %p211 = pneg %p205
      %p212 = scmp.eq.s32.totalorder %s21, 1
      %p213 = por %p211, %p212
      %p214 = scmp.ne.s32.totalorder %s206, %s209
      %p215 = scmp.eq.s32.totalorder %s21, 0
      %p216 = por %p214, %p215
      %p217 = scmp.ne.s32.totalorder %s206, %s209
      %p218 = scmp.eq.s32.totalorder %s26, 1
      %p219 = por %p217, %p218
      %p220 = scmp.ne.s32.totalorder %s209, %s210
      %p221 = scmp.eq.s32.totalorder %s26, 0
      %p222 = por %p220, %p221
      %p223 = scmp.ne.s32.totalorder %s209, %s210
      %p224 = scmp.eq.s32.totalorder %s27, 1
      %p225 = por %p223, %p224
      %p227 = scmp.ne.s32.totalorder %s210, %s226
      %p228 = scmp.eq.s32.totalorder %s27, 0
      %p229 = por %p227, %p228
      %p230 = scmp.le.s32.totalorder 1, %s21
      %p231 = scmp.lt.s32.totalorder %s21, 3
      %p232 = pnand %p230, %p231
      %p233 = pneg %p232
      // Predicated region
      $region9: #{tpu_custom_call.1} parent=5 // pred_check
        _
      $region10: #{tpu_custom_call.1} parent=5 // pred_check_branch
        %235 = sbr.rel (%p232) target = $region12
      $region11: #{tpu_custom_call.1} parent=5 // pred_region
        %s236 = ssub.s32 %s21, 1
        // Predicated region
        $region13: #{tpu_custom_call.1} parent=11 // pred_check
          %p237 = pneg %p54
        $region14: #{tpu_custom_call.1} parent=11 // pred_check_branch
          %239 = sbr.rel (%p237) target = $region16
        $region15: #{tpu_custom_call.1} parent=11 // pred_region
          %s241 = ssub.s32 128, 128
          %242 = vsyncadd [#allocation3], %s241
          %s244 = sshll.u32 [#allocation2], 4
          %s245 = int_to_ptr.vmem [resolvable:$true] %s244
          %247 = dma.hbm_to_vmem [thread:$0]  %s0, 128, %s245, [#allocation3]
        $region16: #{tpu_custom_call.1} parent=11 // pred_fallthru
          _
      $region12: #{tpu_custom_call.1} parent=5 // pred_fallthru
        _
      %p248 = scmp.lt.s32.totalorder %s21, 2
      // Predicated region
      $region17: #{tpu_custom_call.1} parent=5 // pred_check
        %p249 = pneg %p248
      $region18: #{tpu_custom_call.1} parent=5 // pred_check_branch
        %251 = sbr.rel (%p249) target = $region20
      $region19: #{tpu_custom_call.1} parent=5 // pred_region
        // Predicated region
        $region21: #{tpu_custom_call.1} parent=19 // pred_check
          %p252 = pneg %p78
        $region22: #{tpu_custom_call.1} parent=19 // pred_check_branch
          %254 = sbr.rel (%p252) target = $region24
        $region23: #{tpu_custom_call.1} parent=19 // pred_region
          %s255 = sand.u32 %s21, 1
          %s256 = scalar_lea.sflag [#allocation6], %s255
          %s257 = sand.u32 %s68, 1
          %s258 = smul.addr %s257, 128
          %s259 = scalar_lea.vmem [#allocation5], %s258
          %s260 = smul.u32 %s28, 2
          %s261 = sadd.s32 %s260, %s29
          %s262 = smul.u32 16, %s261
          %s264 = ssub.s32 2048, 2048
          %265 = vsyncadd %s256, %s264
          %s266 = smul.addr %s262, 128
          %s267 = scalar_lea.hbm %s1, %s266
          %s268 = sshll.u32 %s259, 4
          %s269 = int_to_ptr.vmem [resolvable:$true] %s268
          %274 = dma.hbm_to_vmem [thread:$0]  %s267, 2048, %s269, %s256, 128, 128, 8
        $region24: #{tpu_custom_call.1} parent=19 // pred_fallthru
          _
        // Predicated region
        $region25: #{tpu_custom_call.1} parent=19 // pred_check
          %p275 = pneg %p108
        $region26: #{tpu_custom_call.1} parent=19 // pred_check_branch
          %277 = sbr.rel (%p275) target = $region28
        $region27: #{tpu_custom_call.1} parent=19 // pred_region
          %s278 = sand.u32 %s21, 1
          %s279 = scalar_lea.sflag [#allocation6], %s278
          %s280 = sand.u32 %s98, 1
          %s281 = smul.addr %s280, 8
          %s282 = scalar_lea.vmem [#allocation7], %s281
          %s283 = smul.u32 %s28, 2
          %s284 = sadd.s32 %s283, %s29
          %s286 = ssub.s32 128, 128
          %287 = vsyncadd %s279, %s286
          %s288 = smul.addr %s284, 128
          %s289 = scalar_lea.hbm %s2, %s288
          %s291 = sshll.u32 %s282, 4
          %s292 = int_to_ptr.vmem [resolvable:$true] %s291
          %294 = dma.hbm_to_vmem [thread:$0]  %s289, 128, %s292, %s279
        $region28: #{tpu_custom_call.1} parent=19 // pred_fallthru
          _
        // Predicated region
        $region29: #{tpu_custom_call.1} parent=19 // pred_check
          %p295 = pneg %p138
        $region30: #{tpu_custom_call.1} parent=19 // pred_check_branch
          %297 = sbr.rel (%p295) target = $region32
        $region31: #{tpu_custom_call.1} parent=19 // pred_region
          %s298 = sand.u32 %s128, 1
          %s299 = scalar_lea.sflag [#allocation9], %s298
          %s300 = sand.u32 %s128, 1
          %s301 = smul.addr %s300, 128
          %s302 = scalar_lea.vmem [#allocation8], %s301
          %s303 = smul.u32 %s28, 2
          %s304 = sadd.s32 %s303, %s29
          %s305 = smul.u32 16, %s304
          %s307 = ssub.s32 2048, 2048
          %308 = vsyncadd %s299, %s307
          %s309 = smul.addr %s305, 128
          %s310 = scalar_lea.hbm %s3, %s309
          %s311 = sshll.u32 %s302, 4
          %s312 = int_to_ptr.vmem [resolvable:$true] %s311
          %317 = dma.hbm_to_vmem [thread:$0]  %s310, 2048, %s312, %s299, 128, 128, 8
        $region32: #{tpu_custom_call.1} parent=19 // pred_fallthru
          _
      $region20: #{tpu_custom_call.1} parent=5 // pred_fallthru
        _
      %p318 = scmp.le.s32.totalorder 1, %s21
      %p319 = scmp.lt.s32.totalorder %s21, 3
      %p320 = pnand %p318, %p319
      %p321 = pneg %p320
      // Predicated region
      $region33: #{tpu_custom_call.1} parent=5 // pred_check
        _
      $region34: #{tpu_custom_call.1} parent=5 // pred_check_branch
        %323 = sbr.rel (%p320) target = $region36
      $region35: #{tpu_custom_call.1} parent=5 // pred_region
        %s324 = ssub.s32 %s21, 1
        // Predicated region
        $region37: #{tpu_custom_call.1} parent=35 // pred_check
          %p325 = pneg %p54
        $region38: #{tpu_custom_call.1} parent=35 // pred_check_branch
          %327 = sbr.rel (%p325) target = $region40
        $region39: #{tpu_custom_call.1} parent=35 // pred_region
          %328 = dma.done [#allocation3], 128
        $region40: #{tpu_custom_call.1} parent=35 // pred_fallthru
          _
        %s329 = sand.u32 %s26, 1
        %s330 = scalar_lea.sflag [#allocation6], %s329
        %s331 = sand.u32 %s71, 1
        %s332 = smul.addr %s331, 128
        %s333 = scalar_lea.vmem [#allocation5], %s332
        // Predicated region
        $region41: #{tpu_custom_call.1} parent=35 // pred_check
          %p334 = pneg %p84
        $region42: #{tpu_custom_call.1} parent=35 // pred_check_branch
          %336 = sbr.rel (%p334) target = $region44
        $region43: #{tpu_custom_call.1} parent=35 // pred_region
          %337 = dma.done %s330, 2048
        $region44: #{tpu_custom_call.1} parent=35 // pred_fallthru
          _
        %s338 = sand.u32 %s26, 1
        %s339 = scalar_lea.sflag [#allocation6], %s338
        %s340 = sand.u32 %s101, 1
        %s341 = smul.addr %s340, 8
        %s342 = scalar_lea.vmem [#allocation7], %s341
        // Predicated region
        $region45: #{tpu_custom_call.1} parent=35 // pred_check
          %p343 = pneg %p114
        $region46: #{tpu_custom_call.1} parent=35 // pred_check_branch
          %345 = sbr.rel (%p343) target = $region48
        $region47: #{tpu_custom_call.1} parent=35 // pred_region
          %346 = dma.done %s339, 128
        $region48: #{tpu_custom_call.1} parent=35 // pred_fallthru
          _
        %s347 = sand.u32 %s131, 1
        %s348 = scalar_lea.sflag [#allocation9], %s347
        %s349 = sand.u32 %s131, 1
        %s350 = smul.addr %s349, 128
        %s351 = scalar_lea.vmem [#allocation8], %s350
        // Predicated region
        $region49: #{tpu_custom_call.1} parent=35 // pred_check
          %p352 = pneg %p144
        $region50: #{tpu_custom_call.1} parent=35 // pred_check_branch
          %354 = sbr.rel (%p352) target = $region52
        $region51: #{tpu_custom_call.1} parent=35 // pred_region
          %355 = dma.done %s348, 2048
        $region52: #{tpu_custom_call.1} parent=35 // pred_fallthru
          _
        %p356 = pneg %p54
        %p357 = pneg %p51
        %s358 = sand.u32 %s26, 1
        %s359 = scalar_lea.sflag [#allocation6], %s358
        %s360 = sand.u32 %s71, 1
        %s361 = smul.addr %s360, 128
        %s362 = scalar_lea.vmem [#allocation5], %s361
        %p363 = pneg %p84
        %p364 = pneg %p81
        %s365 = sand.u32 %s26, 1
        %s366 = scalar_lea.sflag [#allocation6], %s365
        %s367 = sand.u32 %s101, 1
        %s368 = smul.addr %s367, 8
        %s369 = scalar_lea.vmem [#allocation7], %s368
        %p370 = pneg %p114
        %p371 = pneg %p111
        %s372 = sand.u32 %s131, 1
        %s373 = scalar_lea.sflag [#allocation9], %s372
        %s374 = sand.u32 %s131, 1
        %s375 = smul.addr %s374, 128
        %s376 = scalar_lea.vmem [#allocation8], %s375
        %p377 = pneg %p144
        %p378 = pneg %p141
        %p379 = pneg %p170
        %p380 = pneg %p167
        %p381 = scmp.lt.s32.totalorder %s30, 0
        %s382 = scalar_select %p381, %s30, 0
        %s383 = smul.addr %s382, 8
        %s384 = scalar_lea.vmem %s4, %s383
        %p385 = pneg %p196
        %p386 = pneg %p193
        %p387 = scmp.lt.s32.totalorder %s30, 0
        %s388 = scalar_select %p387, %s30, 0
        %s389 = smul.addr %s388, 8
        %s390 = scalar_lea.vmem %s5, %s389
        %p391 = pneg %p222
        %p392 = pneg %p219
        %s393 = smul.u32 %s30, 2
        %s394 = sadd.s32 %s393, %s31
        %s395 = smul.u32 16, %s394
        %s396 = smul.u32 %s30, 2
        %s397 = sadd.s32 %s396, %s31
        %s398 = smul.u32 %s30, 2
        %s399 = sadd.s32 %s398, %s31
        %s400 = smul.u32 16, %s399
        %p401 = scmp.lt.s32.totalorder %s30, 0
        %s402 = scalar_select %p401, %s30, 0
        %s403 = smul.addr %s402, 8
        %s404 = scalar_lea.vmem %s4, %s403
        %p405 = scmp.lt.s32.totalorder %s30, 0
        %s406 = scalar_select %p405, %s30, 0
        %s407 = smul.addr %s406, 8
        %s408 = scalar_lea.vmem %s5, %s407
        %p409 = scmp.eq.s32.totalorder %s31, 0
        // Predicated region
        $region53: #{tpu_custom_call.1} parent=35 // pred_check
          %p410 = pneg %p409
        $region54: #{tpu_custom_call.1} parent=35 // pred_check_branch
          %412 = sbr.rel (%p410) target = $region56
        $region55: #{tpu_custom_call.1} parent=35 // pred_region
          %vm413 = vcmask 7168
          %414 = vst.msk [vmem:[%s404] sm:$0xff] %vm413, -inf
          %415 = vst.msk [vmem:[%s408] sm:$0xff] %vm413, 0.0
          %416 = vst [vmem:[#allocation10] sm:$0xff] 0.0
        $region56: #{tpu_custom_call.1} parent=35 // pred_fallthru
          _
        %v417 = vld [vmem:[#allocation2] sm:$0xff]
        %v418 = vld [vmem:[%s333] sm:$0xff]
        %v419 = vld [vmem:[%s333 + $0x8] sm:$0xff]
        %v420 = vld [vmem:[%s333 + $0x10] sm:$0xff]
        %v421 = vld [vmem:[%s333 + $0x18] sm:$0xff]
        %v422 = vld [vmem:[%s333 + $0x20] sm:$0xff]
        %v423 = vld [vmem:[%s333 + $0x28] sm:$0xff]
        %v424 = vld [vmem:[%s333 + $0x30] sm:$0xff]
        %v425 = vld [vmem:[%s333 + $0x38] sm:$0xff]
        %v426 = vld [vmem:[%s333 + $0x40] sm:$0xff]
        %v427 = vld [vmem:[%s333 + $0x48] sm:$0xff]
        %v428 = vld [vmem:[%s333 + $0x50] sm:$0xff]
        %v429 = vld [vmem:[%s333 + $0x58] sm:$0xff]
        %v430 = vld [vmem:[%s333 + $0x60] sm:$0xff]
        %v431 = vld [vmem:[%s333 + $0x68] sm:$0xff]
        %v432 = vld [vmem:[%s333 + $0x70] sm:$0xff]
        %v433 = vld [vmem:[%s333 + $0x78] sm:$0xff]
        %v434 = vld [vmem:[%s342] sm:$0xff]
        %435 = vmatprep.subr.mxu0 0.0
        %436 = vmatpush1.xpose.msra.mxu0 %v433
        %437 = vmatprep.subr.mxu0 0.0
        %438 = vmatpush1.xpose.msra.mxu0 %v432
        %439 = vmatprep.subr.mxu0 0.0
        %440 = vmatpush1.xpose.msra.mxu0 %v431
        %441 = vmatprep.subr.mxu0 0.0
        %442 = vmatpush1.xpose.msra.mxu0 %v430
        %443 = vmatprep.subr.mxu0 0.0
        %444 = vmatpush1.xpose.msra.mxu0 %v429
        %445 = vmatprep.subr.mxu0 0.0
        %446 = vmatpush1.xpose.msra.mxu0 %v428
        %447 = vmatprep.subr.mxu0 0.0
        %448 = vmatpush1.xpose.msra.mxu0 %v427
        %449 = vmatprep.subr.mxu0 0.0
        %450 = vmatpush1.xpose.msra.mxu0 %v426
        %451 = vmatprep.subr.mxu0 0.0
        %452 = vmatpush1.xpose.msra.mxu0 %v425
        %453 = vmatprep.subr.mxu0 0.0
        %454 = vmatpush1.xpose.msra.mxu0 %v424
        %455 = vmatprep.subr.mxu0 0.0
        %456 = vmatpush1.xpose.msra.mxu0 %v423
        %457 = vmatprep.subr.mxu0 0.0
        %458 = vmatpush1.xpose.msra.mxu0 %v422
        %459 = vmatprep.subr.mxu0 0.0
        %460 = vmatpush1.xpose.msra.mxu0 %v421
        %461 = vmatprep.subr.mxu0 0.0
        %462 = vmatpush1.xpose.msra.mxu0 %v420
        %463 = vmatprep.subr.mxu0 0.0
        %464 = vmatpush1.xpose.msra.mxu0 %v419
        %465 = vmatprep.subr.mxu0 0.0
        %466 = vmatpush1.xpose.msra.mxu0 %v418
        %467 = vmatprep.subr.mxu0 0.0
        %468 = vmatpush2.xpose.msra.mxu0 0.0
        %469 = vmatprep.subr.mxu0 0.0
        %470 = vmatpush2.xpose.msra.mxu0 0.0
        %471 = vmatprep.subr.mxu0 0.0
        %472 = vmatpush2.xpose.msra.mxu0 0.0
        %473 = vmatprep.subr.mxu0 0.0
        %474 = vmatpush2.xpose.msra.mxu0 0.0
        %475 = vmatprep.subr.mxu0 0.0
        %476 = vmatpush2.xpose.msra.mxu0 0.0
        %477 = vmatprep.subr.mxu0 0.0
        %478 = vmatpush2.xpose.msra.mxu0 0.0
        %479 = vmatprep.subr.mxu0 0.0
        %480 = vmatpush2.xpose.msra.mxu0 0.0
        %481 = vmatprep.subr.mxu0 0.0
        %482 = vmatpush2.xpose.msra.mxu0 0.0
        %483 = vmatprep.subr.mxu0 0.0
        %484 = vmatpush2.xpose.msra.mxu0 0.0
        %485 = vmatprep.subr.mxu0 0.0
        %486 = vmatpush2.xpose.msra.mxu0 0.0
        %487 = vmatprep.subr.mxu0 0.0
        %488 = vmatpush2.xpose.msra.mxu0 0.0
        %489 = vmatprep.subr.mxu0 0.0
        %490 = vmatpush2.xpose.msra.mxu0 0.0
        %491 = vmatprep.subr.mxu0 0.0
        %492 = vmatpush2.xpose.msra.mxu0 0.0
        %493 = vmatprep.subr.mxu0 0.0
        %494 = vmatpush2.xpose.msra.mxu0 0.0
        %495 = vmatprep.subr.mxu0 0.0
        %496 = vmatpush2.xpose.msra.mxu0 0.0
        %497 = vmatprep.subr.mxu0 0.0
        %498 = vmatpush2.xpose.msra.mxu0 0.0
        %499 = vmatprep.mubr.f32.mxu0 0.0
        %500 = vmatmul.mubr.f32.gmra.mxu0 %v417
        %v501 = vpop.f32.mrf.mxu0
        %v502 = vadd.f32 %v434, %v501
        %v503 = vpop.f32.mrf.mxu0
        %504 = vdwg.mxu0
        %v505 = vld [vmem:[%s404] sm:$0xff]
        %506 = vmax.xlane.f32.xlu0 %v502
        %v507 = vpop.xlane.xlu0 %506
        %v508 = vmax.f32 %v505, %v507
        %vm509 = vcmp.eq.f32.partialorder %v508, -inf
        %v510 = vsel %vm509, 0.0, %v508
        %v511 = vsub.f32 %v505, %v510
        %v512 = vmul.f32 %v511, 1.442695
        %v513 = vpow.pop %v512
        %515 = vset.pattern.permute.xlu0 0
        %516 = vperm.xlu0 %515, %v510
        %v517 = vpop.permute.xlu0 %516
        %v519 = vsub.f32 %v502, %v517
        %v520 = vmul.f32 %v519, 1.442695
        %v521 = vpow.pop %v520
        %v522 = vld [vmem:[%s408] sm:$0xff]
        %v523 = vmul.f32 %v513, %v522
        %524 = vadd.xlane.f32.xlu0 %v521
        %v525 = vpop.xlane.xlu0 %524
        %v526 = vadd.f32 %v523, %v525
        %vm527 = vcmask 7168
        %528 = vst.msk [vmem:[%s408] sm:$0xff] %vm527, %v526
        %v529 = vld [vmem:[#allocation10] sm:$0xff]
        %531 = vset.pattern.permute.xlu0 0
        %532 = vperm.xlu0 %531, %v513
        %v533 = vpop.permute.xlu0 %532
        %v535 = vmul.f32 %v533, %v529
        %v536 = vld [vmem:[%s351] sm:$0xff]
        %v537 = vld [vmem:[%s351 + $0x8] sm:$0xff]
        %v538 = vld [vmem:[%s351 + $0x10] sm:$0xff]
        %v539 = vld [vmem:[%s351 + $0x18] sm:$0xff]
        %v540 = vld [vmem:[%s351 + $0x20] sm:$0xff]
        %v541 = vld [vmem:[%s351 + $0x28] sm:$0xff]
        %v542 = vld [vmem:[%s351 + $0x30] sm:$0xff]
        %v543 = vld [vmem:[%s351 + $0x38] sm:$0xff]
        %v544 = vld [vmem:[%s351 + $0x40] sm:$0xff]
        %v545 = vld [vmem:[%s351 + $0x48] sm:$0xff]
        %v546 = vld [vmem:[%s351 + $0x50] sm:$0xff]
        %v547 = vld [vmem:[%s351 + $0x58] sm:$0xff]
        %v548 = vld [vmem:[%s351 + $0x60] sm:$0xff]
        %v549 = vld [vmem:[%s351 + $0x68] sm:$0xff]
        %v550 = vld [vmem:[%s351 + $0x70] sm:$0xff]
        %v551 = vld [vmem:[%s351 + $0x78] sm:$0xff]
        %552 = vmatprep.subr.mxu0 0.0
        %553 = vmatpush1.msra.mxu0 %v551
        %554 = vmatprep.subr.mxu0 0.0
        %555 = vmatpush1.msra.mxu0 %v550
        %556 = vmatprep.subr.mxu0 0.0
        %557 = vmatpush1.msra.mxu0 %v549
        %558 = vmatprep.subr.mxu0 0.0
        %559 = vmatpush1.msra.mxu0 %v548
        %560 = vmatprep.subr.mxu0 0.0
        %561 = vmatpush1.msra.mxu0 %v547
        %562 = vmatprep.subr.mxu0 0.0
        %563 = vmatpush1.msra.mxu0 %v546
        %564 = vmatprep.subr.mxu0 0.0
        %565 = vmatpush1.msra.mxu0 %v545
        %566 = vmatprep.subr.mxu0 0.0
        %567 = vmatpush1.msra.mxu0 %v544
        %568 = vmatprep.subr.mxu0 0.0
        %569 = vmatpush1.msra.mxu0 %v543
        %570 = vmatprep.subr.mxu0 0.0
        %571 = vmatpush1.msra.mxu0 %v542
        %572 = vmatprep.subr.mxu0 0.0
        %573 = vmatpush1.msra.mxu0 %v541
        %574 = vmatprep.subr.mxu0 0.0
        %575 = vmatpush1.msra.mxu0 %v540
        %576 = vmatprep.subr.mxu0 0.0
        %577 = vmatpush1.msra.mxu0 %v539
        %578 = vmatprep.subr.mxu0 0.0
        %579 = vmatpush1.msra.mxu0 %v538
        %580 = vmatprep.subr.mxu0 0.0
        %581 = vmatpush1.msra.mxu0 %v537
        %582 = vmatprep.subr.mxu0 0.0
        %583 = vmatpush1.msra.mxu0 %v536
        %584 = vmatprep.subr.mxu0 0.0
        %585 = vmatpush2.msra.mxu0 0.0
        %586 = vmatprep.subr.mxu0 0.0
        %587 = vmatpush2.msra.mxu0 0.0
        %588 = vmatprep.subr.mxu0 0.0
        %589 = vmatpush2.msra.mxu0 0.0
        %590 = vmatprep.subr.mxu0 0.0
        %591 = vmatpush2.msra.mxu0 0.0
        %592 = vmatprep.subr.mxu0 0.0
        %593 = vmatpush2.msra.mxu0 0.0
        %594 = vmatprep.subr.mxu0 0.0
        %595 = vmatpush2.msra.mxu0 0.0
        %596 = vmatprep.subr.mxu0 0.0
        %597 = vmatpush2.msra.mxu0 0.0
        %598 = vmatprep.subr.mxu0 0.0
        %599 = vmatpush2.msra.mxu0 0.0
        %600 = vmatprep.subr.mxu0 0.0
        %601 = vmatpush2.msra.mxu0 0.0
        %602 = vmatprep.subr.mxu0 0.0
        %603 = vmatpush2.msra.mxu0 0.0
        %604 = vmatprep.subr.mxu0 0.0
        %605 = vmatpush2.msra.mxu0 0.0
        %606 = vmatprep.subr.mxu0 0.0
        %607 = vmatpush2.msra.mxu0 0.0
        %608 = vmatprep.subr.mxu0 0.0
        %609 = vmatpush2.msra.mxu0 0.0
        %610 = vmatprep.subr.mxu0 0.0
        %611 = vmatpush2.msra.mxu0 0.0
        %612 = vmatprep.subr.mxu0 0.0
        %613 = vmatpush2.msra.mxu0 0.0
        %614 = vmatprep.subr.mxu0 0.0
        %615 = vmatpush2.msra.mxu0 0.0
        %616 = vmatprep.mubr.f32.mxu0 0.0
        %617 = vmatmul.mubr.f32.gmra.mxu0 %v521
        %v618 = vpop.f32.mrf.mxu0
        %v619 = vadd.f32 0.0, %v618
        %v620 = vpop.f32.mrf.mxu0
        %621 = vdwg.mxu0
        %v622 = vadd.f32 %v535, %v619
        %623 = vst [vmem:[#allocation10] sm:$0xff] %v622
        %624 = vst.msk [vmem:[%s404] sm:$0xff] %vm527, %v508
        %p625 = scmp.lt.s32.totalorder %s30, 0
        %s626 = scalar_select %p625, %s30, 0
        %s627 = smul.addr %s626, 8
        %s628 = scalar_lea.vmem %s4, %s627
        %p629 = scmp.lt.s32.totalorder %s30, 0
        %s630 = scalar_select %p629, %s30, 0
        %s631 = smul.addr %s630, 8
        %s632 = scalar_lea.vmem %s5, %s631
        // Predicated region
        $region57: #{tpu_custom_call.1} parent=35 // pred_check
          %p633 = pneg %p167
        $region58: #{tpu_custom_call.1} parent=35 // pred_check_branch
          %635 = sbr.rel (%p633) target = $region60
        $region59: #{tpu_custom_call.1} parent=35 // pred_region
          _
        $region60: #{tpu_custom_call.1} parent=35 // pred_fallthru
          _
        // Predicated region
        $region61: #{tpu_custom_call.1} parent=35 // pred_check
          %p636 = pneg %p193
        $region62: #{tpu_custom_call.1} parent=35 // pred_check_branch
          %638 = sbr.rel (%p636) target = $region64
        $region63: #{tpu_custom_call.1} parent=35 // pred_region
          _
        $region64: #{tpu_custom_call.1} parent=35 // pred_fallthru
          _
        // Predicated region
        $region65: #{tpu_custom_call.1} parent=35 // pred_check
          %p639 = pneg %p219
        $region66: #{tpu_custom_call.1} parent=35 // pred_check_branch
          %641 = sbr.rel (%p639) target = $region68
        $region67: #{tpu_custom_call.1} parent=35 // pred_region
          %s643 = ssub.s32 128, 128
          %644 = vsyncadd [#allocation4], %s643
          %s645 = smul.addr %s30, 128
          %s646 = scalar_lea.hbm %s6, %s645
          %s648 = sshll.u32 [#allocation10], 4
          %s649 = int_to_ptr.vmem [resolvable:$true] %s648
          %651 = dma.vmem_to_hbm [thread:$0]  %s649, 128, %s646, [#allocation4]
        $region68: #{tpu_custom_call.1} parent=35 // pred_fallthru
          _
        // Predicated region
        $region69: #{tpu_custom_call.1} parent=35 // pred_check
          %p652 = pneg %p167
        $region70: #{tpu_custom_call.1} parent=35 // pred_check_branch
          %654 = sbr.rel (%p652) target = $region72
        $region71: #{tpu_custom_call.1} parent=35 // pred_region
          %p655 = scmp.lt.s32.totalorder %s30, 0
          %s656 = scalar_select %p655, %s30, 0
          %s657 = smul.addr %s656, 8
          %s658 = scalar_lea.vmem %s4, %s657
        $region72: #{tpu_custom_call.1} parent=35 // pred_fallthru
          _
        // Predicated region
        $region73: #{tpu_custom_call.1} parent=35 // pred_check
          %p659 = pneg %p193
        $region74: #{tpu_custom_call.1} parent=35 // pred_check_branch
          %661 = sbr.rel (%p659) target = $region76
        $region75: #{tpu_custom_call.1} parent=35 // pred_region
          %p662 = scmp.lt.s32.totalorder %s30, 0
          %s663 = scalar_select %p662, %s30, 0
          %s664 = smul.addr %s663, 8
          %s665 = scalar_lea.vmem %s5, %s664
        $region76: #{tpu_custom_call.1} parent=35 // pred_fallthru
          _
        // Predicated region
        $region77: #{tpu_custom_call.1} parent=35 // pred_check
          %p666 = pneg %p219
        $region78: #{tpu_custom_call.1} parent=35 // pred_check_branch
          %668 = sbr.rel (%p666) target = $region80
        $region79: #{tpu_custom_call.1} parent=35 // pred_region
          %669 = dma.done [#allocation4], 128
        $region80: #{tpu_custom_call.1} parent=35 // pred_fallthru
          _
      $region36: #{tpu_custom_call.1} parent=5 // pred_fallthru
        _
      %p670 = scmp.le.s32.totalorder 2, %s21
      // Predicated region
      $region81: #{tpu_custom_call.1} parent=5 // pred_check
        %p671 = pneg %p670
      $region82: #{tpu_custom_call.1} parent=5 // pred_check_branch
        %673 = sbr.rel (%p671) target = $region84
      $region83: #{tpu_custom_call.1} parent=5 // pred_region
        %s674 = ssub.s32 %s21, 2
      $region84: #{tpu_custom_call.1} parent=5 // pred_fallthru
        _
    $region6: #{tpu_custom_call.1} parent=1 // loop_footer
      %s25 = sadd.s32 1, %s21
    $region7: #{tpu_custom_call.1} parent=1 // loop_footer_branch
      %20 = sbr.rel target = $region3
    $region8: #{tpu_custom_call.1} parent=1 // loop_exit
      _
    %675 = vsyncpa [#allocation3], 1
    %s676 = scalar_lea.sflag [#allocation3], 1
    %677 = vsyncpa %s676, 1
    %678 = vsyncpa [#allocation6], 1
    %s679 = scalar_lea.sflag [#allocation6], 1
    %680 = vsyncpa %s679, 1
    %681 = vsyncpa [#allocation9], 1
    %s682 = scalar_lea.sflag [#allocation9], 1
    %683 = vsyncpa %s682, 1
    %684 = vsyncpa [#allocation4], 1
    %s685 = scalar_lea.sflag [#allocation4], 1
    %686 = vsyncpa %s685, 1

</llo_original>
